<compile_context>
chip_gen: v7x
topology: tpu7x:2x2x1
jax: 0.10.0
libtpu: 0.0.40
codegen_flags: <defaults>
</compile_context>

<pallas_src>
import functools

import jax
import jax.numpy as jnp
from jax.experimental import pallas as pl
from jax.experimental.pallas import tpu as pltpu


def _round_up(x, m):
    return ((x + m - 1) // m) * m


def _center_loss_kernel(emb_ref, proto_ref, psq_ref, lbl_ref, cls_ref,
                        loss_ref, norm_ref, acc_ref,
                        *, n_valid, p_valid, tile_n, rows_padded, cols_padded):
    i = pl.program_id(0)
    last = pl.num_programs(0) - 1

    @pl.when(i == 0)
    def _init():
        acc_ref[0] = 0.0      # sum of clamped masked distances
        acc_ref[1] = 0.0      # sum of per-row L2 norms

    e_raw = emb_ref[...]      # (TN, D_pad), native dtype
    p_raw = proto_ref[...]    # (P_pad, D_pad), native dtype

    # e . p^T with the transpose fused into the MXU feed (contraction on the
    # feature axis of both operands); accumulate in f32.
    dots = jax.lax.dot_general(
        e_raw, p_raw,
        dimension_numbers=(((1,), (1,)), ((), ())),
        preferred_element_type=jnp.float32)                     # (TN, P_pad)

    e32 = e_raw.astype(jnp.float32)
    e_sq = jnp.sum(e32 * e32, axis=-1, keepdims=True)           # (TN, 1)
    dist = e_sq + psq_ref[...] - 2.0 * dots                     # (TN, P_pad)

    # clip(d * mask): masked-out entries contribute exactly 1e-12 each, as in
    # the PyTorch reference (clamp applied to the full masked matrix).
    mask = (lbl_ref[...] == cls_ref[...]).astype(jnp.float32)   # (TN, P_pad)
    clamped = jnp.clip(dist * mask, 1e-12, 1e12)

    # Exclude zero-padded rows (batch) / cols (prototypes).  Masks are built
    # from narrow iotas and only when that axis is actually padded (static).
    tn, pp = clamped.shape
    row_ok = None
    if rows_padded:
        row_ok = (jax.lax.broadcasted_iota(jnp.int32, (tn, 1), 0)
                  + i * tile_n) < n_valid                        # (TN, 1)
    col_ok = None
    if cols_padded:
        col_ok = jax.lax.broadcasted_iota(jnp.int32, (1, pp), 1) < p_valid

    if row_ok is not None and col_ok is not None:
        clamped = jnp.where(row_ok & col_ok, clamped, 0.0)
    elif row_ok is not None:
        clamped = jnp.where(row_ok, clamped, 0.0)
    elif col_ok is not None:
        clamped = jnp.where(col_ok, clamped, 0.0)
    acc_ref[0] += jnp.sum(clamped)

    # Zero-padded rows have e_sq == 0 -> sqrt == 0, so no mask needed here.
    acc_ref[1] += jnp.sum(jnp.sqrt(e_sq))

    @pl.when(i == last)
    def _finalize():
        inv_n = jnp.float32(1.0 / n_valid)       # static constant
        loss_ref[0, 0] = acc_ref[0] * inv_n
        norm_ref[0, 0] = acc_ref[1] * inv_n


def center_loss(embed, labels, protos, class_labels, w=1.0, tile_n=512):
    """JAX/Pallas equivalent of CenterLoss.forward.

    Returns (loss * w, log) with log = {'CenterLoss': loss, 'norm': norm}.
    """
    N, D = embed.shape
    P, Dp = protos.shape
    assert D == Dp, "embed / protos feature dims must match"

    protos = protos.astype(embed.dtype)          # single MXU input dtype

    LANE = 128
    D_pad = _round_up(D, LANE)
    P_pad = _round_up(P, LANE)

    # Batch tile: multiple of 8 (sublane), capped so the double-buffered
    # embedding stream stays comfortably under scoped VMEM on all generations.
    bytes_per_row = D_pad * jnp.dtype(embed.dtype).itemsize
    max_tn = max(8, ((8 * 1024 * 1024) // bytes_per_row) // 8 * 8)
    TN = min(_round_up(N, 8), _round_up(tile_n, 8), max_tn)
    N_pad = _round_up(N, TN)

    emb = jnp.pad(embed, ((0, N_pad - N), (0, D_pad - D)))
    pro = jnp.pad(protos, ((0, P_pad - P), (0, D_pad - D)))
    lbl = jnp.pad(labels.astype(jnp.int32), (0, N_pad - N),
                  constant_values=-1).reshape(N_pad, 1)
    cls = jnp.pad(class_labels.astype(jnp.int32), (0, P_pad - P),
                  constant_values=-2).reshape(1, P_pad)
    pro32 = pro.astype(jnp.float32)
    p_sq = jnp.sum(pro32 * pro32, axis=-1).reshape(1, P_pad)    # (1, P_pad)

    kernel = functools.partial(_center_loss_kernel,
                               n_valid=N, p_valid=P, tile_n=TN,
                               rows_padded=(N_pad != N),
                               cols_padded=(P_pad != P))

    loss, norm = pl.pallas_call(
        kernel,
        out_shape=(jax.ShapeDtypeStruct((1, 1), jnp.float32),
                   jax.ShapeDtypeStruct((1, 1), jnp.float32)),
        grid=(N_pad // TN,),
        in_specs=[
            pl.BlockSpec((TN, D_pad), lambda i: (i, 0)),      # embeddings (streamed)
            pl.BlockSpec((P_pad, D_pad), lambda i: (0, 0)),   # prototypes (resident)
            pl.BlockSpec((1, P_pad), lambda i: (0, 0)),       # ||p||^2 (resident)
            pl.BlockSpec((TN, 1), lambda i: (i, 0)),          # labels (streamed)
            pl.BlockSpec((1, P_pad), lambda i: (0, 0)),       # class labels (resident)
        ],
        out_specs=(
            pl.BlockSpec(memory_space=pltpu.MemorySpace.SMEM),
            pl.BlockSpec(memory_space=pltpu.MemorySpace.SMEM),
        ),
        scratch_shapes=[pltpu.SMEM((2,), jnp.float32)],
        compiler_params=pltpu.CompilerParams(
            dimension_semantics=("arbitrary",),
            vmem_limit_bytes=32 * 1024 * 1024,
        ),
    )(emb, pro, p_sq, lbl, cls)

    loss = loss[0, 0]
    norm = norm[0, 0]
    log = {'CenterLoss': loss, 'norm': norm}
    return loss * jnp.asarray(w, dtype=loss.dtype), log


def _reference(embed, labels, protos, class_labels, w):
    e = embed.astype(jnp.float32)
    p = protos.astype(jnp.float32)
    norm = jnp.mean(jnp.linalg.norm(e, axis=1))
    d = jnp.sum((e[:, None, :] - p[None, :, :]) ** 2, axis=-1)
    mask = (labels[:, None] == class_labels[None, :]).astype(jnp.float32)
    loss = jnp.sum(jnp.clip(d * mask, 1e-12, 1e12)) / e.shape[0]
    return loss * w, loss, norm


if __name__ == "__main__":
    key = jax.random.PRNGKey(0)
    k_emb, k_proto, k_lbl = jax.random.split(key, 3)

    N, D, P = 8, 32, 4
    embed = jax.random.normal(k_emb, (N, D), dtype=jnp.float32)
    protos = jax.random.normal(k_proto, (P, D), dtype=jnp.float32)
    class_labels = jnp.array([3, 7, 11, 19], dtype=jnp.int32)   # arbitrary class ids
    labels = class_labels[jax.random.randint(k_lbl, (N,), 0, P)]
    w = 0.5

    scaled_loss, log = center_loss(embed, labels, protos, class_labels, w=w)
    jax.block_until_ready(scaled_loss)
    jax.block_until_ready(log['CenterLoss'])
    jax.block_until_ready(log['norm'])

    ref_scaled, ref_loss, ref_norm = _reference(embed, labels, protos,
                                                class_labels, w)
    assert jnp.allclose(scaled_loss, ref_scaled, rtol=1e-4, atol=1e-5), \
        (scaled_loss, ref_scaled)
    assert jnp.allclose(log['CenterLoss'], ref_loss, rtol=1e-4, atol=1e-5), \
        (log['CenterLoss'], ref_loss)
    assert jnp.allclose(log['norm'], ref_norm, rtol=1e-4, atol=1e-5), \
        (log['norm'], ref_norm)

    print("KERNEL_OK")
</pallas_src>

<mosaic_0001>
module attributes {stable_mosaic.version = 11 : i64} {
  func.func @_center_loss_kernel(%arg0: i32, %arg1: memref<8x128xf32, #tpu.memory_space<vmem>>, %arg2: memref<128x128xf32, #tpu.memory_space<vmem>>, %arg3: memref<1x128xf32, #tpu.memory_space<vmem>>, %arg4: memref<8x1xi32, #tpu.memory_space<vmem>>, %arg5: memref<1x128xi32, #tpu.memory_space<vmem>>, %arg6: memref<1x1xf32, #tpu.memory_space<smem>>, %arg7: memref<1x1xf32, #tpu.memory_space<smem>>, %arg8: memref<2xf32, #tpu.memory_space<smem>>) attributes {dimension_semantics = [#tpu.dimension_semantics<arbitrary>], iteration_bounds = array<i64: 1>, scalar_prefetch = 0 : i64, scratch_operands = 1 : i64, tpu.core_type = #tpu.core_type<tc>, window_params = [{transform_indices = @transform_0, window_bounds = array<i64: 8, 128>}, {pipeline_mode = #tpu.pipeline_mode<synchronous>, transform_indices = @transform_1, window_bounds = array<i64: 128, 128>}, {pipeline_mode = #tpu.pipeline_mode<synchronous>, transform_indices = @transform_2, window_bounds = array<i64: 1, 128>}, {transform_indices = @transform_3, window_bounds = array<i64: 8, 1>}, {pipeline_mode = #tpu.pipeline_mode<synchronous>, transform_indices = @transform_4, window_bounds = array<i64: 1, 128>}, {transform_indices = @transform_5, window_bounds = array<i64: 1, 1>}, {transform_indices = @transform_6, window_bounds = array<i64: 1, 1>}]} {
    %c0_i32 = arith.constant 0 : i32
    %0 = arith.cmpi eq, %arg0, %c0_i32 : i32
    %1 = arith.extui %0 : i1 to i32
    %c0_i32_0 = arith.constant 0 : i32
    %2 = arith.cmpi ne, %1, %c0_i32_0 : i32
    scf.if %2 {
      %cst_22 = arith.constant 0.000000e+00 : f32
      %c0_23 = arith.constant 0 : index
      %53 = memref.load %arg8[%c0_23] : memref<2xf32, #tpu.memory_space<smem>>
      memref.store %cst_22, %arg8[%c0_23] : memref<2xf32, #tpu.memory_space<smem>>
      %cst_24 = arith.constant 0.000000e+00 : f32
      %c1_25 = arith.constant 1 : index
      %54 = memref.load %arg8[%c1_25] : memref<2xf32, #tpu.memory_space<smem>>
      memref.store %cst_24, %arg8[%c1_25] : memref<2xf32, #tpu.memory_space<smem>>
    } else {
    }
    %c0 = arith.constant 0 : index
    %c0_1 = arith.constant 0 : index
    %3 = vector.load %arg1[%c0, %c0_1] : memref<8x128xf32, #tpu.memory_space<vmem>>, vector<8x128xf32>
    %c0_2 = arith.constant 0 : index
    %c0_3 = arith.constant 0 : index
    %4 = vector.load %arg2[%c0_2, %c0_3] : memref<128x128xf32, #tpu.memory_space<vmem>>, vector<128x128xf32>
    %cst = arith.constant dense<0.000000e+00> : vector<8x128xf32>
    %5 = tpu.matmul %3, %4, %cst {dimension_numbers = #tpu.dot_dimension_numbers<[1], [1], [0], [0], [0, 0, 1, 0], [], []>} : vector<8x128xf32>, vector<128x128xf32>, vector<8x128xf32> -> vector<8x128xf32>
    %6 = arith.mulf %3, %3 : vector<8x128xf32>
    %cst_4 = arith.constant dense<0.000000e+00> : vector<8xf32>
    %7 = vector.multi_reduction <add>, %6, %cst_4 [1] : vector<8x128xf32> to vector<8xf32>
    %8 = vector.shape_cast %7 : vector<8xf32> to vector<8x1xf32>
    %c0_5 = arith.constant 0 : index
    %c0_6 = arith.constant 0 : index
    %9 = vector.load %arg3[%c0_5, %c0_6] : memref<1x128xf32, #tpu.memory_space<vmem>>, vector<1x128xf32>
    %10 = vector.broadcast %8 : vector<8x1xf32> to vector<8x128xf32>
    %11 = vector.broadcast %9 : vector<1x128xf32> to vector<8x128xf32>
    %12 = arith.addf %10, %11 : vector<8x128xf32>
    %cst_7 = arith.constant 2.000000e+00 : f32
    %13 = vector.broadcast %cst_7 : f32 to vector<8x128xf32>
    %14 = arith.mulf %13, %5 : vector<8x128xf32>
    %15 = arith.subf %12, %14 : vector<8x128xf32>
    %c0_8 = arith.constant 0 : index
    %c0_9 = arith.constant 0 : index
    %16 = vector.load %arg4[%c0_8, %c0_9] : memref<8x1xi32, #tpu.memory_space<vmem>>, vector<8x1xi32>
    %c0_10 = arith.constant 0 : index
    %c0_11 = arith.constant 0 : index
    %17 = vector.load %arg5[%c0_10, %c0_11] : memref<1x128xi32, #tpu.memory_space<vmem>>, vector<1x128xi32>
    %18 = vector.broadcast %16 : vector<8x1xi32> to vector<8x128xi32>
    %19 = vector.broadcast %17 : vector<1x128xi32> to vector<8x128xi32>
    %20 = arith.cmpi eq, %18, %19 : vector<8x128xi32>
    %21 = arith.extui %20 : vector<8x128xi1> to vector<8x128xi32>
    %22 = arith.sitofp %21 : vector<8x128xi32> to vector<8x128xf32>
    %23 = arith.mulf %15, %22 : vector<8x128xf32>
    %cst_12 = arith.constant 9.99999996E-13 : f32
    %cst_13 = arith.constant 9.99999995E+11 : f32
    %24 = vector.broadcast %cst_12 : f32 to vector<8x128xf32>
    %25 = arith.maximumf %24, %23 : vector<8x128xf32>
    %26 = vector.broadcast %cst_13 : f32 to vector<8x128xf32>
    %27 = arith.minimumf %26, %25 : vector<8x128xf32>
    %28 = tpu.iota {dimensions = array<i32: 1>} : vector<1x128xi32>
    %c4_i32 = arith.constant 4 : i32
    %29 = vector.broadcast %c4_i32 : i32 to vector<1x128xi32>
    %30 = arith.cmpi slt, %28, %29 : vector<1x128xi32>
    %cst_14 = arith.constant 0.000000e+00 : f32
    %31 = vector.shape_cast %30 : vector<1x128xi1> to vector<1x128xi1>
    %32 = vector.broadcast %31 : vector<1x128xi1> to vector<8x128xi1>
    %33 = vector.broadcast %cst_14 : f32 to vector<8x128xf32>
    %34 = arith.select %32, %27, %33 : vector<8x128xi1>, vector<8x128xf32>
    %c0_15 = arith.constant 0 : index
    %35 = memref.load %arg8[%c0_15] : memref<2xf32, #tpu.memory_space<smem>>
    %36 = vector.shape_cast %34 : vector<8x128xf32> to vector<1x8x128xf32>
    %cst_16 = arith.constant dense<0.000000e+00> : vector<1xf32>
    %37 = vector.multi_reduction <add>, %36, %cst_16 [1, 2] : vector<1x8x128xf32> to vector<1xf32>
    %38 = vector.shape_cast %37 : vector<1xf32> to vector<1x1x1xf32>
    %39 = vector.extract %38[0, 0, 0] : f32 from vector<1x1x1xf32>
    %40 = arith.addf %35, %39 : f32
    %c0_17 = arith.constant 0 : index
    %41 = memref.load %arg8[%c0_17] : memref<2xf32, #tpu.memory_space<smem>>
    memref.store %40, %arg8[%c0_17] : memref<2xf32, #tpu.memory_space<smem>>
    %c1 = arith.constant 1 : index
    %42 = memref.load %arg8[%c1] : memref<2xf32, #tpu.memory_space<smem>>
    %43 = math.sqrt %8 : vector<8x1xf32>
    %44 = vector.shape_cast %43 : vector<8x1xf32> to vector<1x8x1xf32>
    %cst_18 = arith.constant dense<0.000000e+00> : vector<1xf32>
    %45 = vector.multi_reduction <add>, %44, %cst_18 [1, 2] : vector<1x8x1xf32> to vector<1xf32>
    %46 = vector.shape_cast %45 : vector<1xf32> to vector<1x1x1xf32>
    %47 = vector.extract %46[0, 0, 0] : f32 from vector<1x1x1xf32>
    %48 = arith.addf %42, %47 : f32
    %c1_19 = arith.constant 1 : index
    %49 = memref.load %arg8[%c1_19] : memref<2xf32, #tpu.memory_space<smem>>
    memref.store %48, %arg8[%c1_19] : memref<2xf32, #tpu.memory_space<smem>>
    %c0_i32_20 = arith.constant 0 : i32
    %50 = arith.cmpi eq, %arg0, %c0_i32_20 : i32
    %51 = arith.extui %50 : i1 to i32
    %c0_i32_21 = arith.constant 0 : i32
    %52 = arith.cmpi ne, %51, %c0_i32_21 : i32
    scf.if %52 {
      %c0_22 = arith.constant 0 : index
      %53 = memref.load %arg8[%c0_22] : memref<2xf32, #tpu.memory_space<smem>>
      %cst_23 = arith.constant 1.250000e-01 : f32
      %54 = arith.mulf %53, %cst_23 : f32
      %c0_24 = arith.constant 0 : index
      %c0_25 = arith.constant 0 : index
      %55 = memref.load %arg6[%c0_24, %c0_25] : memref<1x1xf32, #tpu.memory_space<smem>>
      memref.store %54, %arg6[%c0_24, %c0_25] : memref<1x1xf32, #tpu.memory_space<smem>>
      %c1_26 = arith.constant 1 : index
      %56 = memref.load %arg8[%c1_26] : memref<2xf32, #tpu.memory_space<smem>>
      %cst_27 = arith.constant 1.250000e-01 : f32
      %57 = arith.mulf %56, %cst_27 : f32
      %c0_28 = arith.constant 0 : index
      %c0_29 = arith.constant 0 : index
      %58 = memref.load %arg7[%c0_28, %c0_29] : memref<1x1xf32, #tpu.memory_space<smem>>
      memref.store %57, %arg7[%c0_28, %c0_29] : memref<1x1xf32, #tpu.memory_space<smem>>
    } else {
    }
    return
  }
  func.func @transform_0(%arg0: i32) -> (i32, i32) {
    %c0_i32 = arith.constant 0 : i32
    %c0_i32_0 = arith.constant 0 : i32
    return %arg0, %c0_i32 : i32, i32
  }
  func.func @transform_1(%arg0: i32) -> (i32, i32) {
    %c0_i32 = arith.constant 0 : i32
    %c0_i32_0 = arith.constant 0 : i32
    %c0_i32_1 = arith.constant 0 : i32
    return %c0_i32, %c0_i32_0 : i32, i32
  }
  func.func @transform_2(%arg0: i32) -> (i32, i32) {
    %c0_i32 = arith.constant 0 : i32
    %c0_i32_0 = arith.constant 0 : i32
    %c0_i32_1 = arith.constant 0 : i32
    return %c0_i32, %c0_i32_0 : i32, i32
  }
  func.func @transform_3(%arg0: i32) -> (i32, i32) {
    %c0_i32 = arith.constant 0 : i32
    %c0_i32_0 = arith.constant 0 : i32
    return %arg0, %c0_i32 : i32, i32
  }
  func.func @transform_4(%arg0: i32) -> (i32, i32) {
    %c0_i32 = arith.constant 0 : i32
    %c0_i32_0 = arith.constant 0 : i32
    %c0_i32_1 = arith.constant 0 : i32
    return %c0_i32, %c0_i32_0 : i32, i32
  }
  func.func @transform_5(%arg0: i32) -> (i32, i32) {
    %c0_i32 = arith.constant 0 : i32
    %c0_i32_0 = arith.constant 0 : i32
    %c0_i32_1 = arith.constant 0 : i32
    return %c0_i32, %c0_i32_0 : i32, i32
  }
  func.func @transform_6(%arg0: i32) -> (i32, i32) {
    %c0_i32 = arith.constant 0 : i32
    %c0_i32_0 = arith.constant 0 : i32
    %c0_i32_1 = arith.constant 0 : i32
    return %c0_i32, %c0_i32_0 : i32, i32
  }
}

</mosaic_0001>

<llo_original>
// kernel: tpu_custom_call.1
$region0: #{tpu_custom_call.1}
  #allocation0 [shape = 'u32[]', space=smem, size = 0x4, offset = 0x4, fixed_abs, tag = 'smem constant byte address 0x4 - core index']
  #allocation1 [shape = 'u32[144,128]{1,0:T(1,128)}', space=vmem, size = 0x12000, scoped, tag = 'internal scratch']
  #allocation2 [shape = 'f32[2]{0:T(128)}', space=smem, size = 0x200, scoped, tag = 'scratch operand']
  %s0 = inlined_call_operand.vmem [shape: f32[8,128], index: 0, kind: input, shape index: {}]
  %s1 = inlined_call_operand.hbm [shape: f32[128,128], index: 1, kind: input, shape index: {}]
  %s2 = inlined_call_operand.vmem [shape: f32[1,128], index: 2, kind: input, shape index: {}]
  %s3 = inlined_call_operand.vmem [shape: s32[8,1], index: 3, kind: input, shape index: {}]
  %s4 = inlined_call_operand.vmem [shape: s32[1,128], index: 4, kind: input, shape index: {}]
  %s5 = inlined_call_operand.hbm [shape: f32[1,1], index: 5, kind: output, shape index: {0}]
  %s6 = inlined_call_operand.hbm [shape: f32[1,1], index: 6, kind: output, shape index: {1}]
  %7 = xla_tuple %s5, %s6
  %s8 = sld [smem:[#allocation0]]
  $region50: #{tpu_custom_call.1} parent=0
    _
  %s10 = ssub.s32 1, %s8
  %s11 = scalar_select 0, %s10, %s8
  $region1: #{tpu_custom_call.1} parent=0
    #allocation3 [shape = 'u8[65536]{0}', space=vmem, size = 0x10000, scoped, tag = 'input window, operand 1, single buffered']
    #allocation4 [shape = 's32[1]{0}', space=sflag, size = 0x4, scoped, tag = 'scoped memory for tpu_custom_call.1']
    #allocation5 [shape = 's32[1]{0}', space=sflag, size = 0x4, scoped, tag = 'scoped memory for tpu_custom_call.1']
    #allocation6 [shape = 'u8[512]{0}', space=smem, size = 0x200, scoped, tag = 'output window, operand 0, single buffered']
    #allocation7 [shape = 'u8[512]{0}', space=smem, size = 0x200, scoped, tag = 'output window, operand 1, single buffered']
    #allocation8 [shape = 's32[1]{0}', space=sflag, size = 0x4, scoped, tag = 'scoped memory for tpu_custom_call.1']
    %12 = vsyncpa [#allocation4], 0
    %13 = vsyncpa [#allocation5], 0
    %14 = vsyncpa [#allocation8], 0
    // Predicated region
    $region2: #{tpu_custom_call.1} parent=1 // pred_check
      _
    $region3: #{tpu_custom_call.1} parent=1 // pred_check_branch
      %16 = sbr.rel (0) target = $region5
    $region4: #{tpu_custom_call.1} parent=1 // pred_region
      _
    $region5: #{tpu_custom_call.1} parent=1 // pred_fallthru
      _
    // Predicated region
    $region6: #{tpu_custom_call.1} parent=1 // pred_check
      _
    $region7: #{tpu_custom_call.1} parent=1 // pred_check_branch
      %18 = sbr.rel (0) target = $region9
    $region8: #{tpu_custom_call.1} parent=1 // pred_region
      %s20 = ssub.s32 2048, 2048
      %21 = vsyncadd [#allocation4], %s20
      %s22 = sshll.u32 [#allocation3], 4
      %s23 = int_to_ptr.vmem [resolvable:$true] %s22
      %28 = dma.hbm_to_vmem [thread:$0]  %s1, 2048, %s23, [#allocation4], 128, 128, 8
    $region9: #{tpu_custom_call.1} parent=1 // pred_fallthru
      _
    // Predicated region
    $region10: #{tpu_custom_call.1} parent=1 // pred_check
      _
    $region11: #{tpu_custom_call.1} parent=1 // pred_check_branch
      %30 = sbr.rel (0) target = $region13
    $region12: #{tpu_custom_call.1} parent=1 // pred_region
      _
    $region13: #{tpu_custom_call.1} parent=1 // pred_fallthru
      _
    // Predicated region
    $region14: #{tpu_custom_call.1} parent=1 // pred_check
      _
    $region15: #{tpu_custom_call.1} parent=1 // pred_check_branch
      %32 = sbr.rel (0) target = $region17
    $region16: #{tpu_custom_call.1} parent=1 // pred_region
      _
    $region17: #{tpu_custom_call.1} parent=1 // pred_fallthru
      _
    // Predicated region
    $region18: #{tpu_custom_call.1} parent=1 // pred_check
      _
    $region19: #{tpu_custom_call.1} parent=1 // pred_check_branch
      %34 = sbr.rel (0) target = $region21
    $region20: #{tpu_custom_call.1} parent=1 // pred_region
      _
    $region21: #{tpu_custom_call.1} parent=1 // pred_fallthru
      _
    // Predicated region
    $region22: #{tpu_custom_call.1} parent=1 // pred_check
      _
    $region23: #{tpu_custom_call.1} parent=1 // pred_check_branch
      %36 = sbr.rel (0) target = $region25
    $region24: #{tpu_custom_call.1} parent=1 // pred_region
      %37 = dma.done [#allocation4], 2048
    $region25: #{tpu_custom_call.1} parent=1 // pred_fallthru
      _
    %p38 = scmp.eq.s32.totalorder 0, 0
    // Predicated region
    $region26: #{tpu_custom_call.1} parent=1 // pred_check
      %p39 = pneg %p38
    $region27: #{tpu_custom_call.1} parent=1 // pred_check_branch
      %41 = sbr.rel (%p39) target = $region29
    $region28: #{tpu_custom_call.1} parent=1 // pred_region
      %s42 = scalar_lea.smem [#allocation2], 0
      %43 = sst [smem:[%s42]] 0.0
      %s44 = scalar_lea.smem [#allocation2], 1
      %45 = sst [smem:[%s44]] 0.0
    $region29: #{tpu_custom_call.1} parent=1 // pred_fallthru
      _
    %v46 = vld [vmem:[%s0] sm:$0xff]
    %v47 = vld [vmem:[#allocation3] sm:$0xff]
    %v48 = vld [vmem:[#allocation3 + $0x8] sm:$0xff]
    %v49 = vld [vmem:[#allocation3 + $0x10] sm:$0xff]
    %v50 = vld [vmem:[#allocation3 + $0x18] sm:$0xff]
    %v51 = vld [vmem:[#allocation3 + $0x20] sm:$0xff]
    %v52 = vld [vmem:[#allocation3 + $0x28] sm:$0xff]
    %v53 = vld [vmem:[#allocation3 + $0x30] sm:$0xff]
    %v54 = vld [vmem:[#allocation3 + $0x38] sm:$0xff]
    %v55 = vld [vmem:[#allocation3 + $0x40] sm:$0xff]
    %v56 = vld [vmem:[#allocation3 + $0x48] sm:$0xff]
    %v57 = vld [vmem:[#allocation3 + $0x50] sm:$0xff]
    %v58 = vld [vmem:[#allocation3 + $0x58] sm:$0xff]
    %v59 = vld [vmem:[#allocation3 + $0x60] sm:$0xff]
    %v60 = vld [vmem:[#allocation3 + $0x68] sm:$0xff]
    %v61 = vld [vmem:[#allocation3 + $0x70] sm:$0xff]
    %v62 = vld [vmem:[#allocation3 + $0x78] sm:$0xff]
    %63 = vmatprep.subr.mxu0 0.0
    %64 = vmatpush1.xpose.msra.mxu0 %v47
    %65 = vmatprep.subr.mxu0 0.0
    %66 = vmatpush1.xpose.msra.mxu0 %v48
    %67 = vmatprep.subr.mxu0 0.0
    %68 = vmatpush1.xpose.msra.mxu0 %v49
    %69 = vmatprep.subr.mxu0 0.0
    %70 = vmatpush1.xpose.msra.mxu0 %v50
    %71 = vmatprep.subr.mxu0 0.0
    %72 = vmatpush1.xpose.msra.mxu0 %v51
    %73 = vmatprep.subr.mxu0 0.0
    %74 = vmatpush1.xpose.msra.mxu0 %v52
    %75 = vmatprep.subr.mxu0 0.0
    %76 = vmatpush1.xpose.msra.mxu0 %v53
    %77 = vmatprep.subr.mxu0 0.0
    %78 = vmatpush1.xpose.msra.mxu0 %v54
    %79 = vmatprep.subr.mxu0 0.0
    %80 = vmatpush1.xpose.msra.mxu0 %v55
    %81 = vmatprep.subr.mxu0 0.0
    %82 = vmatpush1.xpose.msra.mxu0 %v56
    %83 = vmatprep.subr.mxu0 0.0
    %84 = vmatpush1.xpose.msra.mxu0 %v57
    %85 = vmatprep.subr.mxu0 0.0
    %86 = vmatpush1.xpose.msra.mxu0 %v58
    %87 = vmatprep.subr.mxu0 0.0
    %88 = vmatpush1.xpose.msra.mxu0 %v59
    %89 = vmatprep.subr.mxu0 0.0
    %90 = vmatpush1.xpose.msra.mxu0 %v60
    %91 = vmatprep.subr.mxu0 0.0
    %92 = vmatpush1.xpose.msra.mxu0 %v61
    %93 = vmatprep.subr.mxu0 0.0
    %94 = vmatpush1.xpose.msra.mxu0 %v62
    %95 = vmatprep.subr.mxu0 0.0
    %96 = vmatpush1.xpose.msra.mxu0 0.0
    %97 = vmatprep.subr.mxu0 0.0
    %98 = vmatpush1.xpose.msra.mxu0 0.0
    %99 = vmatprep.subr.mxu0 0.0
    %100 = vmatpush1.xpose.msra.mxu0 0.0
    %101 = vmatprep.subr.mxu0 0.0
    %102 = vmatpush1.xpose.msra.mxu0 0.0
    %103 = vmatprep.subr.mxu0 0.0
    %104 = vmatpush1.xpose.msra.mxu0 0.0
    %105 = vmatprep.subr.mxu0 0.0
    %106 = vmatpush1.xpose.msra.mxu0 0.0
    %107 = vmatprep.subr.mxu0 0.0
    %108 = vmatpush1.xpose.msra.mxu0 0.0
    %109 = vmatprep.subr.mxu0 0.0
    %110 = vmatpush1.xpose.msra.mxu0 0.0
    %111 = vmatprep.subr.mxu0 0.0
    %112 = vmatpush1.xpose.msra.mxu0 0.0
    %113 = vmatprep.subr.mxu0 0.0
    %114 = vmatpush1.xpose.msra.mxu0 0.0
    %115 = vmatprep.subr.mxu0 0.0
    %116 = vmatpush1.xpose.msra.mxu0 0.0
    %117 = vmatprep.subr.mxu0 0.0
    %118 = vmatpush1.xpose.msra.mxu0 0.0
    %119 = vmatprep.subr.mxu0 0.0
    %120 = vmatpush1.xpose.msra.mxu0 0.0
    %121 = vmatprep.subr.mxu0 0.0
    %122 = vmatpush1.xpose.msra.mxu0 0.0
    %123 = vmatprep.subr.mxu0 0.0
    %124 = vmatpush1.xpose.msra.mxu0 0.0
    %125 = vmatprep.subr.mxu0 0.0
    %126 = vmatpush1.xpose.msra.mxu0 0.0
    %127 = vmatprep.mubr.f32.mxu0 0.0
    %128 = vmatmul.mubr.f32.gmra.mrb[0].mxu0 %v46
    %v129 = vpop.f32.mrb[0].mxu0
    %v130 = vadd.f32 0.0, %v129
    %v131 = vpop.f32.mrb[0].mxu0
    %132 = vdwg.mxu0
    %v133 = vmul.f32 %v46, %v46
    %134 = vadd.xlane.f32.xlu0 %v133
    %v135 = vpop.xlane.xlu0 %134
    %v136 = vld [vmem:[%s2] sm:$0x1]
    %v138 = vlaneseq
    %v139 = vshrl.u32 %v138, 7
    %v140 = vsub.s32 0, %v139
    %v141 = vrot.slane %v136, %v140
    %v143 = vadd.f32 %v135, %v141
    %v144 = vmul.f32 %v130, 2.0
    %v145 = vsub.f32 %v143, %v144
    %v146 = vld [vmem:[%s3] sm:$0xff]
    %v147 = vld [vmem:[%s4] sm:$0x1]
    %148 = vset.pattern.permute.xlu0 0
    %149 = vperm.xlu0 %148, %v146
    %v150 = vpop.permute.xlu0 %149
    %v151 = vlaneseq
    %v152 = vshrl.u32 %v151, 7
    %v153 = vsub.s32 0, %v152
    %v154 = vrot.slane %v147, %v153
    %vm155 = vcmp.eq.s32.totalorder %v150, %v154
    %v156 = vsel %vm155, 1, 0
    %v157 = vcvt.s32.f32 %v156
    %v158 = vmul.f32 %v145, %v157
    %v159 = vmax.f32 %v158, 1e-12
    %v160 = vmin.f32 %v159, 1e+12
    %v161 = vlaneseq
    %v162 = vand.u32 %v161, 127
    %vm163 = vcmp.lt.s32.totalorder %v162, 4
    %v164 = vsel %vm163, 1, 0
    %vm165 = vcmp.eq.s32.totalorder %v164, 1
    %v166 = vsel %vm165, %v160, 0.0
    %s167 = sld [smem:[#allocation2]]
    %168 = vadd.xlane.f32.xlu0 %v166
    %v169 = vpop.xlane.xlu0 %168
    %v170 = vrot.slane %v169, 4
    %v171 = vadd.f32 %v169, %v170
    %v172 = vrot.slane %v171, 2
    %v173 = vadd.f32 %v171, %v172
    %v174 = vrot.slane %v173, 1
    %v175 = vadd.f32 %v173, %v174
    %s176 = vtos %v175
    %s177 = sadd.f32 %s167, %s176
    %s178 = scalar_lea.smem [#allocation2], 0
    %179 = sst [smem:[%s178]] %s177
    %s180 = sld [smem:[#allocation2 + $0x1]]
    %v181 = vrsqrt.pop %v135
    %v182 = vmul.f32 %v135, %v181
    %vm183 = vcmp.eq.f32.partialorder %v135, inf
    %v184 = vsel %vm183, %v135, %v182
    %vm185 = vcmp.eq.f32.partialorder %v135, 0.0
    %v186 = vand.u32 %v135, 2147483648
    %v187 = vsel %vm185, %v186, %v184
    %vm188 = vcmask 7168
    %v189 = vsel %vm188, %v187, 0.0
    %190 = vadd.xlane.f32.xlu0 %v189
    %v191 = vpop.xlane.xlu0 %190
    %v192 = vrot.slane %v191, 4
    %v193 = vadd.f32 %v191, %v192
    %v194 = vrot.slane %v193, 2
    %v195 = vadd.f32 %v193, %v194
    %v196 = vrot.slane %v195, 1
    %v197 = vadd.f32 %v195, %v196
    %s198 = vtos %v197
    %s199 = sadd.f32 %s180, %s198
    %s200 = scalar_lea.smem [#allocation2], 1
    %201 = sst [smem:[%s200]] %s199
    // Predicated region
    $region30: #{tpu_custom_call.1} parent=1 // pred_check
      %p202 = pneg %p38
    $region31: #{tpu_custom_call.1} parent=1 // pred_check_branch
      %204 = sbr.rel (%p202) target = $region33
    $region32: #{tpu_custom_call.1} parent=1 // pred_region
      %s205 = sld [smem:[#allocation2]]
      %s206 = smul.f32 %s205, 0.125
      %s207 = scalar_lea.smem [#allocation6], 0
      %208 = sst [smem:[%s207]] %s206
      %s209 = sld [smem:[#allocation2 + $0x1]]
      %s210 = smul.f32 %s209, 0.125
      %s211 = scalar_lea.smem [#allocation7], 0
      %212 = sst [smem:[%s211]] %s210
    $region33: #{tpu_custom_call.1} parent=1 // pred_fallthru
      _
    // Predicated region
    $region34: #{tpu_custom_call.1} parent=1 // pred_check
      _
    $region35: #{tpu_custom_call.1} parent=1 // pred_check_branch
      %214 = sbr.rel (0) target = $region37
    $region36: #{tpu_custom_call.1} parent=1 // pred_region
      %s216 = ssub.s32 16, 16
      %217 = vsyncadd [#allocation5], %s216
      %220 = dma.smem_to_hbm [#allocation6], 16, %s5, [#allocation5]
    $region37: #{tpu_custom_call.1} parent=1 // pred_fallthru
      _
    // Predicated region
    $region38: #{tpu_custom_call.1} parent=1 // pred_check
      _
    $region39: #{tpu_custom_call.1} parent=1 // pred_check_branch
      %222 = sbr.rel (0) target = $region41
    $region40: #{tpu_custom_call.1} parent=1 // pred_region
      %s224 = ssub.s32 16, 16
      %225 = vsyncadd [#allocation8], %s224
      %228 = dma.smem_to_hbm [#allocation7], 16, %s6, [#allocation8]
    $region41: #{tpu_custom_call.1} parent=1 // pred_fallthru
      _
    // Predicated region
    $region42: #{tpu_custom_call.1} parent=1 // pred_check
      _
    $region43: #{tpu_custom_call.1} parent=1 // pred_check_branch
      %230 = sbr.rel (0) target = $region45
    $region44: #{tpu_custom_call.1} parent=1 // pred_region
      %231 = dma.done [#allocation5], 16
    $region45: #{tpu_custom_call.1} parent=1 // pred_fallthru
      _
    // Predicated region
    $region46: #{tpu_custom_call.1} parent=1 // pred_check
      _
    $region47: #{tpu_custom_call.1} parent=1 // pred_check_branch
      %233 = sbr.rel (0) target = $region49
    $region48: #{tpu_custom_call.1} parent=1 // pred_region
      %234 = dma.done [#allocation8], 16
    $region49: #{tpu_custom_call.1} parent=1 // pred_fallthru
      _
    %235 = sfence
    %236 = vsyncpa [#allocation4], 1
    %237 = vsyncpa [#allocation5], 1
    %238 = vsyncpa [#allocation8], 1

</llo_original>
